<compile_context>
chip_gen: v7x
topology: tpu7x:2x2x1
jax: 0.10.0
libtpu: 0.0.40
codegen_flags: <defaults>
</compile_context>

<pallas_src>
import functools
import math

import jax
import jax.numpy as jnp
import numpy as np
from jax.experimental import pallas as pl
from jax.experimental.pallas import tpu as pltpu


_DEF_TILE_BYTES = 4 * 1024 * 1024     # target size of one x tile (~4 MiB)
_DEF_VMEM_LIMIT = 48 * 1024 * 1024    # fits v5e/v6e (128 MiB) and v7x (64 MiB)


def make_pe(max_len: int, d_model: int) -> jnp.ndarray:
    """Sinusoidal positional-encoding buffer, same recipe/layout as the torch buffer.

    pe[:, 0::2] = sin(pos * div_term); pe[:, 1::2] = cos(pos * div_term)
    returned shape: (max_len, 1, d_model)
    """
    position = jnp.arange(0, max_len, dtype=jnp.float32)[:, None]               # (L, 1)
    div_term = jnp.exp(
        jnp.arange(0, d_model, 2, dtype=jnp.float32) * (-math.log(10000.0) / d_model)
    )                                                                            # (D/2,)
    angles = position * div_term                                                 # (L, D/2)
    pe = jnp.zeros((max_len, d_model), dtype=jnp.float32)
    pe = pe.at[:, 0::2].set(jnp.sin(angles))
    pe = pe.at[:, 1::2].set(jnp.cos(angles))
    return pe[:, None, :]                                                        # (L, 1, D)


# ----------------------------------------------------------------------------- kernels


def _maybe_dropout(y, seed_ref, *, dropout_p, train):
    """Inverted dropout via the TPU hardware PRNG (integer threshold on raw bits)."""
    if not (train and dropout_p > 0.0):
        return y
    # TODO(synk): uses the TPU stateful PRNG -> cannot bit-match torch's RNG stream,
    # and the mask depends on the tiling (seeded per seq-tile). Requires a real TPU.
    pltpu.prng_seed(seed_ref[0] + pl.program_id(0))
    bits = pltpu.bitcast(pltpu.prng_random_bits(y.shape), jnp.uint32)
    thresh = np.uint32(min(int(round(float(dropout_p) * 4294967296.0)), 4294967295))
    keep = bits >= thresh
    scale = jnp.asarray(1.0 / (1.0 - float(dropout_p)), dtype=y.dtype)
    return jnp.where(keep, y * scale, jnp.zeros_like(y))


def _bcast_pe_lanes(pe, batch):
    """(tS, D) -> (tS, batch*D): replicate pe along lanes (column layout = b-major)."""
    if batch == 1:
        return pe
    out, n = pe, 1
    while n * 2 <= batch:
        out = jnp.concatenate([out, out], axis=1)
        n *= 2
    if n < batch:
        out = jnp.concatenate([out, _bcast_pe_lanes(pe, batch - n)], axis=1)
    return out


def _posenc2d_kernel(seed_ref, x_ref, pe_ref, o_ref, *, batch, dropout_p, train):
    # x_ref : (tS, B*D)  lane-dense tile
    # pe_ref: (tS, D)    one pe row per sequence position
    y = x_ref[...] + _bcast_pe_lanes(pe_ref[...], batch)
    y = _maybe_dropout(y, seed_ref, dropout_p=dropout_p, train=train)
    o_ref[...] = y.astype(o_ref.dtype)


def _posenc3d_kernel(seed_ref, x_ref, pe_ref, o_ref, *, dropout_p, train):
    # x_ref : (tS, B, D), pe_ref: (tS, 1, D) -> sublane broadcast over batch
    y = x_ref[...] + pe_ref[...]
    y = _maybe_dropout(y, seed_ref, dropout_p=dropout_p, train=train)
    o_ref[...] = y.astype(o_ref.dtype)


# ----------------------------------------------------------------------------- wrapper


def _pick_tile_s(S, row_bytes, target_bytes):
    """Largest divisor of S whose tile is <= ~target_bytes (prefer multiples of 8)."""
    cap = max(1, target_bytes // max(row_bytes, 1))
    if S <= cap:
        return S
    best_any, best_8 = 1, None
    for t in range(1, int(math.isqrt(S)) + 1):
        if S % t == 0:
            for c in (t, S // t):
                if c <= cap:
                    if c > best_any:
                        best_any = c
                    if c % 8 == 0 and (best_8 is None or c > best_8):
                        best_8 = c
    return best_8 if best_8 is not None else best_any


def positional_encoding(x, pe, *, dropout_p=0.1, train=False, seed=0,
                        tile_s=None, tile_bytes=_DEF_TILE_BYTES,
                        vmem_limit_bytes=_DEF_VMEM_LIMIT):
    """x: (S, B, D).  pe: (max_len, 1, D) or (max_len, D).  Returns (S, B, D)."""
    S, B, D = x.shape
    max_len = pe.shape[0]
    assert S <= max_len, "sequence length exceeds positional-encoding max_len"

    pe2 = pe.reshape(max_len, D).astype(x.dtype)       # (L, D); free reshape + cast

    row_bytes = B * D * jnp.dtype(x.dtype).itemsize
    if tile_s is None:
        tile_s = _pick_tile_s(S, row_bytes, tile_bytes)
    assert S % tile_s == 0, "tile_s must divide sequence length"
    grid = (S // tile_s,)

    seed_arr = jnp.asarray([int(seed)], dtype=jnp.int32)
    cparams = pltpu.CompilerParams(
        dimension_semantics=("parallel",),
        vmem_limit_bytes=int(vmem_limit_bytes),
    )

    use_3d = (D % 128 == 0) and (B % 8 == 0)

    if use_3d:
        # trailing (B, D) already sublane/lane dense -> plain broadcast add
        kernel = functools.partial(
            _posenc3d_kernel, dropout_p=float(dropout_p), train=bool(train))
        return pl.pallas_call(
            kernel,
            out_shape=jax.ShapeDtypeStruct((S, B, D), x.dtype),
            grid_spec=pltpu.PrefetchScalarGridSpec(
                num_scalar_prefetch=1,
                grid=grid,
                in_specs=[
                    pl.BlockSpec((tile_s, B, D), lambda i, seed: (i, 0, 0)),
                    pl.BlockSpec((tile_s, 1, D), lambda i, seed: (i, 0, 0)),
                ],
                out_specs=pl.BlockSpec((tile_s, B, D), lambda i, seed: (i, 0, 0)),
            ),
            compiler_params=cparams,
        )(seed_arr, x, pe2[:, None, :])

    # Lane-dense path: flatten (B, D) -> B*D lanes (free reshape), broadcast pe in-kernel.
    x2 = x.reshape(S, B * D)
    kernel = functools.partial(
        _posenc2d_kernel, batch=B, dropout_p=float(dropout_p), train=bool(train))
    out2 = pl.pallas_call(
        kernel,
        out_shape=jax.ShapeDtypeStruct((S, B * D), x.dtype),
        grid_spec=pltpu.PrefetchScalarGridSpec(
            num_scalar_prefetch=1,
            grid=grid,
            in_specs=[
                pl.BlockSpec((tile_s, B * D), lambda i, seed: (i, 0)),
                pl.BlockSpec((tile_s, D), lambda i, seed: (i, 0)),
            ],
            out_specs=pl.BlockSpec((tile_s, B * D), lambda i, seed: (i, 0)),
        ),
        compiler_params=cparams,
    )(seed_arr, x2, pe2)
    return out2.reshape(S, B, D)


# ----------------------------------------------------------------------------- demo


if __name__ == "__main__":
    # Small shapes consistent with the module's forward: x is [seq, batch, d_model]
    S, B, D = 8, 2, 32
    MAX_LEN = 10000

    key = jax.random.PRNGKey(0)
    x = jax.random.normal(key, (S, B, D), dtype=jnp.float32)

    pe = make_pe(MAX_LEN, D)   # (MAX_LEN, 1, D), same layout as the torch buffer

    # eval mode (dropout is identity) — matches module.eval() semantics exactly.
    # The training-mode dropout path uses the TPU hardware PRNG and therefore only
    # lowers on a real TPU (Mosaic); it is intentionally not exercised here.
    out = positional_encoding(x, pe, dropout_p=0.1, train=False)
    out = jax.block_until_ready(out)

    # pure-JAX reference for correctness check
    ref = x + pe[:S]
    assert out.shape == (S, B, D)
    assert out.dtype == x.dtype
    assert jnp.allclose(out, ref, atol=1e-6, rtol=1e-6)

    print("KERNEL_OK")
</pallas_src>

<mosaic_0001>
module attributes {stable_mosaic.version = 11 : i64} {
  func.func @_posenc2d_kernel(%arg0: i32, %arg1: memref<1xi32, #tpu.memory_space<smem>>, %arg2: memref<8x64xf32, #tpu.memory_space<vmem>>, %arg3: memref<8x32xf32, #tpu.memory_space<vmem>>, %arg4: memref<8x64xf32, #tpu.memory_space<vmem>>) attributes {dimension_semantics = [#tpu.dimension_semantics<parallel>], iteration_bounds = array<i64: 1>, scalar_prefetch = 1 : i64, scratch_operands = 0 : i64, tpu.core_type = #tpu.core_type<tc>, window_params = [{transform_indices = @transform_0, window_bounds = array<i64: 8, 64>}, {transform_indices = @transform_1, window_bounds = array<i64: 8, 32>}, {transform_indices = @transform_2, window_bounds = array<i64: 8, 64>}]} {
    %c0 = arith.constant 0 : index
    %c0_0 = arith.constant 0 : index
    %0 = vector.load %arg2[%c0, %c0_0] : memref<8x64xf32, #tpu.memory_space<vmem>>, vector<8x64xf32>
    %c0_1 = arith.constant 0 : index
    %c0_2 = arith.constant 0 : index
    %1 = vector.load %arg3[%c0_1, %c0_2] : memref<8x32xf32, #tpu.memory_space<vmem>>, vector<8x32xf32>
    %2 = tpu.concatenate %1, %1 in 1 : vector<8x32xf32>, vector<8x32xf32> -> vector<8x64xf32>
    %3 = arith.addf %0, %2 : vector<8x64xf32>
    %c0_3 = arith.constant 0 : index
    %c0_4 = arith.constant 0 : index
    %4 = vector.load %arg4[%c0_3, %c0_4] : memref<8x64xf32, #tpu.memory_space<vmem>>, vector<8x64xf32>
    tpu.vector_store %arg4[%c0_3, %c0_4], %3 {strides = array<i32>} : memref<8x64xf32, #tpu.memory_space<vmem>>, vector<8x64xf32>,
    return
  }
  func.func @transform_0(%arg0: i32, %arg1: memref<1xi32, #tpu.memory_space<smem>>) -> (i32, i32) {
    %c0_i32 = arith.constant 0 : i32
    %c0_i32_0 = arith.constant 0 : i32
    return %arg0, %c0_i32 : i32, i32
  }
  func.func @transform_1(%arg0: i32, %arg1: memref<1xi32, #tpu.memory_space<smem>>) -> (i32, i32) {
    %c0_i32 = arith.constant 0 : i32
    %c0_i32_0 = arith.constant 0 : i32
    return %arg0, %c0_i32 : i32, i32
  }
  func.func @transform_2(%arg0: i32, %arg1: memref<1xi32, #tpu.memory_space<smem>>) -> (i32, i32) {
    %c0_i32 = arith.constant 0 : i32
    %c0_i32_0 = arith.constant 0 : i32
    return %arg0, %c0_i32 : i32, i32
  }
}

</mosaic_0001>

<llo_original>
// kernel: tpu_custom_call.1
$region0: #{tpu_custom_call.1}
  #allocation0 [shape = 'u32[]', space=smem, size = 0x4, offset = 0x4, fixed_abs, tag = 'smem constant byte address 0x4 - core index']
  #allocation1 [shape = 'u32[144,128]{1,0:T(1,128)}', space=vmem, size = 0x12000, scoped, tag = 'internal scratch']
  #allocation2 [shape = 's32[1]{0}', space=sflag, size = 0x4, scoped, tag = 'scoped memory for tpu_custom_call.1']
  #allocation3 [shape = 's32[1]{0:T(128)S(6)}', space=smem, size = 0x200, scoped, tag = 'prefetched SMEM operand 0']
  %s0 = inlined_call_operand.<no memory space> [shape: s32[1], index: 0, kind: input, shape index: {}]
  %s1 = inlined_call_operand.vmem [shape: f32[8,64], index: 1, kind: input, shape index: {}]
  %s2 = inlined_call_operand.vmem [shape: f32[10000,32], index: 2, kind: input, shape index: {}]
  %s3 = inlined_call_operand.hbm [shape: f32[8,64], index: 3, kind: output, shape index: {}]
  %s4 = sld [smem:[#allocation0]]
  $region18: #{tpu_custom_call.1} parent=0
    _
  %s6 = ssub.s32 1, %s4
  %s7 = scalar_select 0, %s6, %s4
  %8 = sst [smem:[#allocation3]] %s0
  $region1: #{tpu_custom_call.1} parent=0
    #allocation4 [shape = 'u8[4096]{0}', space=vmem, size = 0x1000, scoped, tag = 'output window, operand 0, single buffered']
    #allocation5 [shape = 's32[1]{0}', space=sflag, size = 0x4, scoped, tag = 'scoped memory for tpu_custom_call.1']
    %9 = vsyncpa [#allocation5], 0
    // Predicated region
    $region2: #{tpu_custom_call.1} parent=1 // pred_check
      _
    $region3: #{tpu_custom_call.1} parent=1 // pred_check_branch
      %11 = sbr.rel (0) target = $region5
    $region4: #{tpu_custom_call.1} parent=1 // pred_region
      _
    $region5: #{tpu_custom_call.1} parent=1 // pred_fallthru
      _
    // Predicated region
    $region6: #{tpu_custom_call.1} parent=1 // pred_check
      _
    $region7: #{tpu_custom_call.1} parent=1 // pred_check_branch
      %13 = sbr.rel (0) target = $region9
    $region8: #{tpu_custom_call.1} parent=1 // pred_region
      _
    $region9: #{tpu_custom_call.1} parent=1 // pred_fallthru
      _
    %v14 = vld [vmem:[%s1] sm:$0xff]
    %v15 = vld [vmem:[%s2] sm:$0xff]
    %17 = vrot.lane.b32.xlu0 %v15, 32
    %v18 = vpop.permute.xlu0 %17
    %vm20 = vcmask 261120
    %v21 = vsel %vm20, %v15, %v18
    %v22 = vadd.f32 %v14, %v21
    %vm23 = vcmask 523264
    %24 = vst.msk [vmem:[#allocation4] sm:$0xff] %vm23, %v22
    // Predicated region
    $region10: #{tpu_custom_call.1} parent=1 // pred_check
      _
    $region11: #{tpu_custom_call.1} parent=1 // pred_check_branch
      %26 = sbr.rel (0) target = $region13
    $region12: #{tpu_custom_call.1} parent=1 // pred_region
      %s28 = ssub.s32 128, 128
      %29 = vsyncadd [#allocation5], %s28
      %s31 = sshll.u32 [#allocation4], 4
      %s32 = int_to_ptr.vmem [resolvable:$true] %s31
      %34 = dma.vmem_to_hbm [thread:$0]  %s32, 128, %s3, [#allocation5]
    $region13: #{tpu_custom_call.1} parent=1 // pred_fallthru
      _
    // Predicated region
    $region14: #{tpu_custom_call.1} parent=1 // pred_check
      _
    $region15: #{tpu_custom_call.1} parent=1 // pred_check_branch
      %36 = sbr.rel (0) target = $region17
    $region16: #{tpu_custom_call.1} parent=1 // pred_region
      %37 = dma.done [#allocation5], 128
    $region17: #{tpu_custom_call.1} parent=1 // pred_fallthru
      _
    %38 = vsyncpa [#allocation5], 1

</llo_original>
